<compile_context>
chip_gen: v5e
topology: v5e:2x2
jax: 0.10.0
libtpu: 0.0.40
codegen_flags: <defaults>
</compile_context>

<pallas_src>
import functools
import math

import jax
import jax.numpy as jnp
from jax import lax
from jax.experimental import pallas as pl
from jax.experimental.pallas import tpu as pltpu


def _round_up(x, m):
    return (x + m - 1) // m * m


def _gelu_exact(y):
    # nn.GELU() default = exact erf formulation, computed in f32.
    return 0.5 * y * (1.0 + lax.erf(y * (1.0 / math.sqrt(2.0))))


# -----------------------------------------------------------------------------
# Fused kernel
# -----------------------------------------------------------------------------
def _attributes_mlp_kernel(*refs, n_hidden, inv_t, true_t, t_tile, needs_mask):
    """Fused mean/max pooling + MLP.

    refs = (x, w1_mean, w1_max, b1, [w_i, b_i]*n_hidden, w_out, b_out,   # in
            out,                                                          # out
            sum_acc, max_acc)                                             # scratch
    """
    x_ref = refs[0]
    w1a_ref, w1b_ref, b1_ref = refs[1], refs[2], refs[3]
    hidden_refs = refs[4:4 + 2 * n_hidden]
    wf_ref = refs[4 + 2 * n_hidden]
    bf_ref = refs[5 + 2 * n_hidden]
    o_ref = refs[6 + 2 * n_hidden]
    sum_acc = refs[7 + 2 * n_hidden]
    max_acc = refs[8 + 2 * n_hidden]

    t_idx = pl.program_id(1)

    @pl.when(t_idx == 0)
    def _init():
        sum_acc[...] = jnp.zeros_like(sum_acc)
        max_acc[...] = jnp.full_like(max_acc, -jnp.inf)

    # ---- streaming mean/max pooling over the sequence (T) axis ----
    x = x_ref[...].astype(jnp.float32)                       # (TB, TT, D)
    if needs_mask:
        rows = t_idx * t_tile + lax.broadcasted_iota(jnp.int32, x.shape, 1)
        valid = rows < true_t
        x_sum = jnp.where(valid, x, 0.0)
        x_max = jnp.where(valid, x, -jnp.inf)
    else:
        x_sum = x
        x_max = x
    sum_acc[...] = sum_acc[...] + jnp.sum(x_sum, axis=1)     # (TB, D)
    max_acc[...] = jnp.maximum(max_acc[...], jnp.max(x_max, axis=1))

    # ---- on the last T step, run the whole MLP with activations resident ----
    @pl.when(t_idx == pl.num_programs(1) - 1)
    def _mlp():
        mean = sum_acc[...] * inv_t                          # (TB, D) f32
        mx = max_acc[...]                                    # (TB, D) f32

        # First linear, concat-free: split the K axis into mean/max halves.
        h = (
            jnp.dot(mean.astype(jnp.bfloat16), w1a_ref[...],
                    preferred_element_type=jnp.float32)
            + jnp.dot(mx.astype(jnp.bfloat16), w1b_ref[...],
                      preferred_element_type=jnp.float32)
            + b1_ref[...]
        )
        h = _gelu_exact(h)

        for i in range(n_hidden):
            w_ref = hidden_refs[2 * i]
            b_ref = hidden_refs[2 * i + 1]
            h = jnp.dot(h.astype(jnp.bfloat16), w_ref[...],
                        preferred_element_type=jnp.float32) + b_ref[...]
            h = _gelu_exact(h)

        out = jnp.dot(h.astype(jnp.bfloat16), wf_ref[...],
                      preferred_element_type=jnp.float32) + bf_ref[...]
        o_ref[...] = out.astype(o_ref.dtype)


# -----------------------------------------------------------------------------
# Wrapper
# -----------------------------------------------------------------------------
def attributes_mlp_forward(x, params):
    """x: (B, T, n_state), params: [(W, b)] with W as (in, out). -> (B, n_attr)."""
    B, T, D = x.shape
    n_lin = len(params)
    n_hidden = n_lin - 2                      # number of (H, H) hidden linears

    w1, b1 = params[0]
    H = w1.shape[1]
    wf, bf = params[-1]
    A = wf.shape[1]

    # --- padding for lane/sublane-dense layout ---
    TB = min(_round_up(B, 8), 128)            # batch tile (sublane axis)
    B_pad = _round_up(B, TB)
    TT = T if T <= 512 else 512               # sequence tile (streamed reduction)
    T_pad = _round_up(T, TT)
    A_pad = _round_up(A, 128)                 # lane-dense final store
    needs_mask = T_pad != T

    x_p = x
    if (B_pad, T_pad) != (B, T):
        x_p = jnp.pad(x, ((0, B_pad - B), (0, T_pad - T), (0, 0)))

    # Split first weight so the mean/max concat never materializes; cast all
    # matmul weights to bf16 (halves weight DMA, MXU-native); biases stay f32.
    w1a = w1[:D].astype(jnp.bfloat16)
    w1b = w1[D:].astype(jnp.bfloat16)
    b1_p = b1.reshape(1, H).astype(jnp.float32)

    hidden_args = []
    for w, b in params[1:-1]:
        hidden_args.append(w.astype(jnp.bfloat16))
        hidden_args.append(b.reshape(1, H).astype(jnp.float32))

    wf_p = jnp.pad(wf, ((0, 0), (0, A_pad - A))).astype(jnp.bfloat16)
    bf_p = jnp.pad(bf.reshape(1, A), ((0, 0), (0, A_pad - A))).astype(jnp.float32)

    nb = B_pad // TB
    nt = T_pad // TT

    const2 = lambda b, t: (0, 0)              # weights resident across the grid
    in_specs = [
        pl.BlockSpec((TB, TT, D), lambda b, t: (b, t, 0)),
        pl.BlockSpec((D, H), const2),
        pl.BlockSpec((D, H), const2),
        pl.BlockSpec((1, H), const2),
    ]
    for _ in range(n_hidden):
        in_specs.append(pl.BlockSpec((H, H), const2))
        in_specs.append(pl.BlockSpec((1, H), const2))
    in_specs.append(pl.BlockSpec((H, A_pad), const2))
    in_specs.append(pl.BlockSpec((1, A_pad), const2))

    kernel = functools.partial(
        _attributes_mlp_kernel,
        n_hidden=n_hidden,
        inv_t=1.0 / T,
        true_t=T,
        t_tile=TT,
        needs_mask=needs_mask,
    )

    flops = 2 * B_pad * (2 * D * H + n_hidden * H * H + H * A_pad)
    weight_args = [w1a, w1b, b1_p] + hidden_args + [wf_p, bf_p]
    bytes_accessed = int(
        x_p.size * x_p.dtype.itemsize
        + sum(int(a.size) * a.dtype.itemsize for a in weight_args)
        + B_pad * A_pad * x.dtype.itemsize
    )

    out = pl.pallas_call(
        kernel,
        out_shape=jax.ShapeDtypeStruct((B_pad, A_pad), x.dtype),
        grid_spec=pltpu.PrefetchScalarGridSpec(
            num_scalar_prefetch=0,
            grid=(nb, nt),
            in_specs=in_specs,
            out_specs=pl.BlockSpec((TB, A_pad), lambda b, t: (b, 0)),
            scratch_shapes=[
                pltpu.VMEM((TB, D), jnp.float32),     # running sum
                pltpu.VMEM((TB, D), jnp.float32),     # running max
            ],
        ),
        compiler_params=pltpu.CompilerParams(
            dimension_semantics=("parallel", "arbitrary"),
            vmem_limit_bytes=32 * 1024 * 1024,
        ),
        cost_estimate=pl.CostEstimate(
            flops=int(flops),
            transcendentals=int(B_pad * H * (1 + n_hidden)),
            bytes_accessed=bytes_accessed,
        ),
    )(x_p, w1a, w1b, b1_p, *hidden_args, wf_p, bf_p)

    return out[:B, :A]


# -----------------------------------------------------------------------------
# Params + pure-JAX reference
# -----------------------------------------------------------------------------
def init_attributes_mlp_params(key, n_state, n_layer, n_attributes, dtype=jnp.float32):
    """Deterministic synthetic params.  Weights stored as (in, out)."""
    dims = [(n_state * 2, n_state * 4)]
    for _ in range(n_layer - 1):
        dims.append((n_state * 4, n_state * 4))
    dims.append((n_state * 4, n_attributes))

    params = []
    for din, dout in dims:
        key, kw, kb = jax.random.split(key, 3)
        w = jax.random.normal(kw, (din, dout), dtype=dtype) * 0.02
        b = jax.random.normal(kb, (1, dout), dtype=dtype) * 0.01
        params.append((w, b))
    return params


def attributes_mlp_reference(x, params):
    """Pure-JAX f32 reference (exact erf GELU)."""
    h = jnp.concatenate([jnp.mean(x, axis=1), jnp.max(x, axis=1)], axis=-1)
    n = len(params)
    for i, (w, b) in enumerate(params):
        h = h @ w + b
        if i != n - 1:
            h = _gelu_exact(h)
    return h


# -----------------------------------------------------------------------------
if __name__ == "__main__":
    n_state = 32
    n_layer = 2
    n_attributes = 16
    B, T = 4, 8

    key = jax.random.PRNGKey(0)
    key, kx = jax.random.split(key)
    x = jax.random.normal(kx, (B, T, n_state), dtype=jnp.float32)

    params = init_attributes_mlp_params(key, n_state, n_layer, n_attributes)

    out = attributes_mlp_forward(x, params)
    out = jax.block_until_ready(out)

    ref = attributes_mlp_reference(x, params)
    assert out.shape == (B, n_attributes), out.shape
    # Kernel uses bf16 MXU operands with f32 accumulation -> loosened tolerance
    # vs the pure-f32 reference.
    assert jnp.allclose(out, ref, atol=2e-2, rtol=2e-2), (
        "mismatch vs reference: max abs diff = "
        f"{float(jnp.max(jnp.abs(out - ref)))}"
    )

    print("KERNEL_OK")
</pallas_src>

<mosaic_0001>
module attributes {stable_mosaic.version = 11 : i64} {
  func.func @_attributes_mlp_kernel(%arg0: i32, %arg1: i32, %arg2: memref<8x8x32xf32, #tpu.memory_space<vmem>>, %arg3: memref<32x128xbf16, #tpu.memory_space<vmem>>, %arg4: memref<32x128xbf16, #tpu.memory_space<vmem>>, %arg5: memref<1x128xf32, #tpu.memory_space<vmem>>, %arg6: memref<128x128xbf16, #tpu.memory_space<vmem>>, %arg7: memref<1x128xf32, #tpu.memory_space<vmem>>, %arg8: memref<128x128xbf16, #tpu.memory_space<vmem>>, %arg9: memref<1x128xf32, #tpu.memory_space<vmem>>, %arg10: memref<8x128xf32, #tpu.memory_space<vmem>>, %arg11: memref<8x32xf32, #tpu.memory_space<vmem>>, %arg12: memref<8x32xf32, #tpu.memory_space<vmem>>) attributes {dimension_semantics = [#tpu.dimension_semantics<parallel>, #tpu.dimension_semantics<arbitrary>], iteration_bounds = array<i64: 1, 1>, scalar_prefetch = 0 : i64, scratch_operands = 2 : i64, tpu.core_type = #tpu.core_type<tc>, window_params = [{transform_indices = @transform_0, window_bounds = array<i64: 8, 8, 32>}, {pipeline_mode = #tpu.pipeline_mode<synchronous>, transform_indices = @transform_1, window_bounds = array<i64: 32, 128>}, {pipeline_mode = #tpu.pipeline_mode<synchronous>, transform_indices = @transform_2, window_bounds = array<i64: 32, 128>}, {pipeline_mode = #tpu.pipeline_mode<synchronous>, transform_indices = @transform_3, window_bounds = array<i64: 1, 128>}, {pipeline_mode = #tpu.pipeline_mode<synchronous>, transform_indices = @transform_4, window_bounds = array<i64: 128, 128>}, {pipeline_mode = #tpu.pipeline_mode<synchronous>, transform_indices = @transform_5, window_bounds = array<i64: 1, 128>}, {pipeline_mode = #tpu.pipeline_mode<synchronous>, transform_indices = @transform_6, window_bounds = array<i64: 128, 128>}, {pipeline_mode = #tpu.pipeline_mode<synchronous>, transform_indices = @transform_7, window_bounds = array<i64: 1, 128>}, {transform_indices = @transform_8, window_bounds = array<i64: 8, 128>}]} {
    %c0_i32 = arith.constant 0 : i32
    %0 = arith.cmpi eq, %arg1, %c0_i32 : i32
    %1 = arith.extui %0 : i1 to i32
    %c0_i32_0 = arith.constant 0 : i32
    %2 = arith.cmpi ne, %1, %c0_i32_0 : i32
    scf.if %2 {
      %cst_14 = arith.constant 0.000000e+00 : f32
      %15 = vector.broadcast %cst_14 : f32 to vector<8x32xf32>
      %c0_15 = arith.constant 0 : index
      %c0_16 = arith.constant 0 : index
      %16 = vector.load %arg11[%c0_15, %c0_16] : memref<8x32xf32, #tpu.memory_space<vmem>>, vector<8x32xf32>
      tpu.vector_store %arg11[%c0_15, %c0_16], %15 {strides = array<i32>} : memref<8x32xf32, #tpu.memory_space<vmem>>, vector<8x32xf32>,
      %cst_17 = arith.constant 0xFF800000 : f32
      %17 = vector.broadcast %cst_17 : f32 to vector<8x32xf32>
      %c0_18 = arith.constant 0 : index
      %c0_19 = arith.constant 0 : index
      %18 = vector.load %arg12[%c0_18, %c0_19] : memref<8x32xf32, #tpu.memory_space<vmem>>, vector<8x32xf32>
      tpu.vector_store %arg12[%c0_18, %c0_19], %17 {strides = array<i32>} : memref<8x32xf32, #tpu.memory_space<vmem>>, vector<8x32xf32>,
    } else {
    }
    %c0 = arith.constant 0 : index
    %c0_1 = arith.constant 0 : index
    %c0_2 = arith.constant 0 : index
    %3 = vector.load %arg2[%c0, %c0_1, %c0_2] : memref<8x8x32xf32, #tpu.memory_space<vmem>>, vector<8x8x32xf32>
    %c0_3 = arith.constant 0 : index
    %c0_4 = arith.constant 0 : index
    %4 = vector.load %arg11[%c0_3, %c0_4] : memref<8x32xf32, #tpu.memory_space<vmem>>, vector<8x32xf32>
    %cst = arith.constant dense<0.000000e+00> : vector<8x32xf32>
    %5 = vector.multi_reduction <add>, %3, %cst [1] : vector<8x8x32xf32> to vector<8x32xf32>
    %6 = arith.addf %4, %5 : vector<8x32xf32>
    %c0_5 = arith.constant 0 : index
    %c0_6 = arith.constant 0 : index
    %7 = vector.load %arg11[%c0_5, %c0_6] : memref<8x32xf32, #tpu.memory_space<vmem>>, vector<8x32xf32>
    tpu.vector_store %arg11[%c0_5, %c0_6], %6 {strides = array<i32>} : memref<8x32xf32, #tpu.memory_space<vmem>>, vector<8x32xf32>,
    %c0_7 = arith.constant 0 : index
    %c0_8 = arith.constant 0 : index
    %8 = vector.load %arg12[%c0_7, %c0_8] : memref<8x32xf32, #tpu.memory_space<vmem>>, vector<8x32xf32>
    %cst_9 = arith.constant dense<0xFF800000> : vector<8x32xf32>
    %9 = vector.multi_reduction <maximumf>, %3, %cst_9 [1] : vector<8x8x32xf32> to vector<8x32xf32>
    %10 = arith.maximumf %8, %9 : vector<8x32xf32>
    %c0_10 = arith.constant 0 : index
    %c0_11 = arith.constant 0 : index
    %11 = vector.load %arg12[%c0_10, %c0_11] : memref<8x32xf32, #tpu.memory_space<vmem>>, vector<8x32xf32>
    tpu.vector_store %arg12[%c0_10, %c0_11], %10 {strides = array<i32>} : memref<8x32xf32, #tpu.memory_space<vmem>>, vector<8x32xf32>,
    %c0_i32_12 = arith.constant 0 : i32
    %12 = arith.cmpi eq, %arg1, %c0_i32_12 : i32
    %13 = arith.extui %12 : i1 to i32
    %c0_i32_13 = arith.constant 0 : i32
    %14 = arith.cmpi ne, %13, %c0_i32_13 : i32
    scf.if %14 {
      %c0_14 = arith.constant 0 : index
      %c0_15 = arith.constant 0 : index
      %15 = vector.load %arg11[%c0_14, %c0_15] : memref<8x32xf32, #tpu.memory_space<vmem>>, vector<8x32xf32>
      %cst_16 = arith.constant 1.250000e-01 : f32
      %16 = vector.broadcast %cst_16 : f32 to vector<8x32xf32>
      %17 = arith.mulf %15, %16 : vector<8x32xf32>
      %c0_17 = arith.constant 0 : index
      %c0_18 = arith.constant 0 : index
      %18 = vector.load %arg12[%c0_17, %c0_18] : memref<8x32xf32, #tpu.memory_space<vmem>>, vector<8x32xf32>
      %19 = arith.truncf %17 : vector<8x32xf32> to vector<8x32xbf16>
      %c0_19 = arith.constant 0 : index
      %c0_20 = arith.constant 0 : index
      %20 = vector.load %arg3[%c0_19, %c0_20] : memref<32x128xbf16, #tpu.memory_space<vmem>>, vector<32x128xbf16>
      %cst_21 = arith.constant dense<0.000000e+00> : vector<8x128xf32>
      %21 = tpu.matmul %19, %20, %cst_21 {dimension_numbers = #tpu.dot_dimension_numbers<[1], [0], [0], [1], [0, 0, 1, 1], [], []>} : vector<8x32xbf16>, vector<32x128xbf16>, vector<8x128xf32> -> vector<8x128xf32>
      %22 = arith.truncf %18 : vector<8x32xf32> to vector<8x32xbf16>
      %c0_22 = arith.constant 0 : index
      %c0_23 = arith.constant 0 : index
      %23 = vector.load %arg4[%c0_22, %c0_23] : memref<32x128xbf16, #tpu.memory_space<vmem>>, vector<32x128xbf16>
      %cst_24 = arith.constant dense<0.000000e+00> : vector<8x128xf32>
      %24 = tpu.matmul %22, %23, %cst_24 {dimension_numbers = #tpu.dot_dimension_numbers<[1], [0], [0], [1], [0, 0, 1, 1], [], []>} : vector<8x32xbf16>, vector<32x128xbf16>, vector<8x128xf32> -> vector<8x128xf32>
      %25 = arith.addf %21, %24 : vector<8x128xf32>
      %c0_25 = arith.constant 0 : index
      %c0_26 = arith.constant 0 : index
      %26 = vector.load %arg5[%c0_25, %c0_26] : memref<1x128xf32, #tpu.memory_space<vmem>>, vector<1x128xf32>
      %27 = vector.broadcast %26 : vector<1x128xf32> to vector<8x128xf32>
      %28 = arith.addf %25, %27 : vector<8x128xf32>
      %cst_27 = arith.constant 5.000000e-01 : f32
      %29 = vector.broadcast %cst_27 : f32 to vector<8x128xf32>
      %30 = arith.mulf %29, %28 : vector<8x128xf32>
      %cst_28 = arith.constant 0.707106769 : f32
      %31 = vector.broadcast %cst_28 : f32 to vector<8x128xf32>
      %32 = arith.mulf %28, %31 : vector<8x128xf32>
      %33 = math.erf %32 : vector<8x128xf32>
      %cst_29 = arith.constant 1.000000e+00 : f32
      %34 = vector.broadcast %cst_29 : f32 to vector<8x128xf32>
      %35 = arith.addf %34, %33 : vector<8x128xf32>
      %36 = arith.mulf %30, %35 : vector<8x128xf32>
      %37 = arith.truncf %36 : vector<8x128xf32> to vector<8x128xbf16>
      %c0_30 = arith.constant 0 : index
      %c0_31 = arith.constant 0 : index
      %38 = vector.load %arg6[%c0_30, %c0_31] : memref<128x128xbf16, #tpu.memory_space<vmem>>, vector<128x128xbf16>
      %cst_32 = arith.constant dense<0.000000e+00> : vector<8x128xf32>
      %39 = tpu.matmul %37, %38, %cst_32 {dimension_numbers = #tpu.dot_dimension_numbers<[1], [0], [0], [1], [0, 0, 1, 1], [], []>} : vector<8x128xbf16>, vector<128x128xbf16>, vector<8x128xf32> -> vector<8x128xf32>
      %c0_33 = arith.constant 0 : index
      %c0_34 = arith.constant 0 : index
      %40 = vector.load %arg7[%c0_33, %c0_34] : memref<1x128xf32, #tpu.memory_space<vmem>>, vector<1x128xf32>
      %41 = vector.broadcast %40 : vector<1x128xf32> to vector<8x128xf32>
      %42 = arith.addf %39, %41 : vector<8x128xf32>
      %cst_35 = arith.constant 5.000000e-01 : f32
      %43 = vector.broadcast %cst_35 : f32 to vector<8x128xf32>
      %44 = arith.mulf %43, %42 : vector<8x128xf32>
      %cst_36 = arith.constant 0.707106769 : f32
      %45 = vector.broadcast %cst_36 : f32 to vector<8x128xf32>
      %46 = arith.mulf %42, %45 : vector<8x128xf32>
      %47 = math.erf %46 : vector<8x128xf32>
      %cst_37 = arith.constant 1.000000e+00 : f32
      %48 = vector.broadcast %cst_37 : f32 to vector<8x128xf32>
      %49 = arith.addf %48, %47 : vector<8x128xf32>
      %50 = arith.mulf %44, %49 : vector<8x128xf32>
      %51 = arith.truncf %50 : vector<8x128xf32> to vector<8x128xbf16>
      %c0_38 = arith.constant 0 : index
      %c0_39 = arith.constant 0 : index
      %52 = vector.load %arg8[%c0_38, %c0_39] : memref<128x128xbf16, #tpu.memory_space<vmem>>, vector<128x128xbf16>
      %cst_40 = arith.constant dense<0.000000e+00> : vector<8x128xf32>
      %53 = tpu.matmul %51, %52, %cst_40 {dimension_numbers = #tpu.dot_dimension_numbers<[1], [0], [0], [1], [0, 0, 1, 1], [], []>} : vector<8x128xbf16>, vector<128x128xbf16>, vector<8x128xf32> -> vector<8x128xf32>
      %c0_41 = arith.constant 0 : index
      %c0_42 = arith.constant 0 : index
      %54 = vector.load %arg9[%c0_41, %c0_42] : memref<1x128xf32, #tpu.memory_space<vmem>>, vector<1x128xf32>
      %55 = vector.broadcast %54 : vector<1x128xf32> to vector<8x128xf32>
      %56 = arith.addf %53, %55 : vector<8x128xf32>
      %c0_43 = arith.constant 0 : index
      %c0_44 = arith.constant 0 : index
      %57 = vector.load %arg10[%c0_43, %c0_44] : memref<8x128xf32, #tpu.memory_space<vmem>>, vector<8x128xf32>
      tpu.vector_store %arg10[%c0_43, %c0_44], %56 {strides = array<i32>} : memref<8x128xf32, #tpu.memory_space<vmem>>, vector<8x128xf32>,
    } else {
    }
    return
  }
  func.func @transform_0(%arg0: i32, %arg1: i32) -> (i32, i32, i32) {
    %c0_i32 = arith.constant 0 : i32
    %c0_i32_0 = arith.constant 0 : i32
    return %arg0, %arg1, %c0_i32 : i32, i32, i32
  }
  func.func @transform_1(%arg0: i32, %arg1: i32) -> (i32, i32) {
    %c0_i32 = arith.constant 0 : i32
    %c0_i32_0 = arith.constant 0 : i32
    %c0_i32_1 = arith.constant 0 : i32
    return %c0_i32, %c0_i32_0 : i32, i32
  }
  func.func @transform_2(%arg0: i32, %arg1: i32) -> (i32, i32) {
    %c0_i32 = arith.constant 0 : i32
    %c0_i32_0 = arith.constant 0 : i32
    %c0_i32_1 = arith.constant 0 : i32
    return %c0_i32, %c0_i32_0 : i32, i32
  }
  func.func @transform_3(%arg0: i32, %arg1: i32) -> (i32, i32) {
    %c0_i32 = arith.constant 0 : i32
    %c0_i32_0 = arith.constant 0 : i32
    %c0_i32_1 = arith.constant 0 : i32
    return %c0_i32, %c0_i32_0 : i32, i32
  }
  func.func @transform_4(%arg0: i32, %arg1: i32) -> (i32, i32) {
    %c0_i32 = arith.constant 0 : i32
    %c0_i32_0 = arith.constant 0 : i32
    %c0_i32_1 = arith.constant 0 : i32
    return %c0_i32, %c0_i32_0 : i32, i32
  }
  func.func @transform_5(%arg0: i32, %arg1: i32) -> (i32, i32) {
    %c0_i32 = arith.constant 0 : i32
    %c0_i32_0 = arith.constant 0 : i32
    %c0_i32_1 = arith.constant 0 : i32
    return %c0_i32, %c0_i32_0 : i32, i32
  }
  func.func @transform_6(%arg0: i32, %arg1: i32) -> (i32, i32) {
    %c0_i32 = arith.constant 0 : i32
    %c0_i32_0 = arith.constant 0 : i32
    %c0_i32_1 = arith.constant 0 : i32
    return %c0_i32, %c0_i32_0 : i32, i32
  }
  func.func @transform_7(%arg0: i32, %arg1: i32) -> (i32, i32) {
    %c0_i32 = arith.constant 0 : i32
    %c0_i32_0 = arith.constant 0 : i32
    %c0_i32_1 = arith.constant 0 : i32
    return %c0_i32, %c0_i32_0 : i32, i32
  }
  func.func @transform_8(%arg0: i32, %arg1: i32) -> (i32, i32) {
    %c0_i32 = arith.constant 0 : i32
    %c0_i32_0 = arith.constant 0 : i32
    return %arg0, %c0_i32 : i32, i32
  }
}

</mosaic_0001>

<llo_original>
// kernel: tpu_custom_call.1
$region0: #{tpu_custom_call.1}
  #allocation0 [shape = 'u32[]', space=smem, size = 0x4, offset = 0x4, fixed_abs, tag = 'smem constant byte address 0x4 - core index']
  #allocation1 [shape = 'u32[72,128]{1,0:T(1,128)}', space=vmem, size = 0x9000, scoped, tag = 'internal scratch']
  #allocation2 [shape = 'f32[8,32]{1,0:T(8,128)}', space=vmem, size = 0x1000, scoped, tag = 'scratch operand']
  #allocation3 [shape = 'f32[8,32]{1,0:T(8,128)}', space=vmem, size = 0x1000, scoped, tag = 'scratch operand']
  %s0 = inlined_call_operand.hbm [shape: f32[8,8,32], index: 0, kind: input, shape index: {}]
  %s1 = inlined_call_operand.hbm [shape: bf16[32,128], index: 1, kind: input, shape index: {}]
  %s2 = inlined_call_operand.hbm [shape: bf16[32,128], index: 2, kind: input, shape index: {}]
  %s3 = inlined_call_operand.vmem [shape: f32[1,128], index: 3, kind: input, shape index: {}]
  %s4 = inlined_call_operand.hbm [shape: bf16[128,128], index: 4, kind: input, shape index: {}]
  %s5 = inlined_call_operand.vmem [shape: f32[1,128], index: 5, kind: input, shape index: {}]
  %s6 = inlined_call_operand.hbm [shape: bf16[128,128], index: 6, kind: input, shape index: {}]
  %s7 = inlined_call_operand.vmem [shape: f32[1,128], index: 7, kind: input, shape index: {}]
  %s8 = inlined_call_operand.hbm [shape: f32[8,128], index: 8, kind: output, shape index: {}]
  %s9 = sld [smem:[#allocation0]]
  $region70: #{tpu_custom_call.1} parent=0
    _
  %s11 = ssub.s32 1, %s9
  %s12 = scalar_select 0, %s11, %s9
  $region1: #{tpu_custom_call.1} parent=0
    #allocation4 [shape = 'u8[32768]{0}', space=vmem, size = 0x8000, scoped, tag = 'input window, operand 0, single buffered']
    #allocation5 [shape = 's32[1]{0}', space=sflag, size = 0x4, scoped, tag = 'scoped memory for tpu_custom_call.1']
    #allocation6 [shape = 's32[1]{0}', space=sflag, size = 0x4, scoped, tag = 'scoped memory for tpu_custom_call.1']
    #allocation7 [shape = 'u8[8192]{0}', space=vmem, size = 0x2000, scoped, tag = 'input window, operand 1, single buffered']
    #allocation8 [shape = 's32[1]{0}', space=sflag, size = 0x4, scoped, tag = 'scoped memory for tpu_custom_call.1']
    #allocation9 [shape = 'u8[8192]{0}', space=vmem, size = 0x2000, scoped, tag = 'input window, operand 2, single buffered']
    #allocation10 [shape = 'u8[32768]{0}', space=vmem, size = 0x8000, scoped, tag = 'input window, operand 4, single buffered']
    #allocation11 [shape = 's32[1]{0}', space=sflag, size = 0x4, scoped, tag = 'scoped memory for tpu_custom_call.1']
    #allocation12 [shape = 'u8[32768]{0}', space=vmem, size = 0x8000, scoped, tag = 'input window, operand 6, single buffered']
    #allocation13 [shape = 'u8[4096]{0}', space=vmem, size = 0x1000, scoped, tag = 'output window, operand 0, single buffered']
    %13 = vsyncpa [#allocation5], 0
    %14 = vsyncpa [#allocation8], 0
    %15 = vsyncpa [#allocation11], 0
    %16 = vsyncpa [#allocation6], 0
    // Predicated region
    $region2: #{tpu_custom_call.1} parent=1 // pred_check
      _
    $region3: #{tpu_custom_call.1} parent=1 // pred_check_branch
      %18 = sbr.rel (0) target = $region5
    $region4: #{tpu_custom_call.1} parent=1 // pred_region
      %20 = vsyncadd [#allocation5], 0
      %s21 = sshll.u32 %s0, 4
      %s22 = int_to_ptr.hbm [resolvable:$true] %s21
      %s23 = sshll.u32 [#allocation4], 4
      %s24 = int_to_ptr.vmem [resolvable:$true] %s23
      %29 = dma.hbm_to_vmem [thread:$0]  %s22, 1024, %s24, [#allocation5], 128, 128, 8
    $region5: #{tpu_custom_call.1} parent=1 // pred_fallthru
      _
    // Predicated region
    $region6: #{tpu_custom_call.1} parent=1 // pred_check
      _
    $region7: #{tpu_custom_call.1} parent=1 // pred_check_branch
      %31 = sbr.rel (0) target = $region9
    $region8: #{tpu_custom_call.1} parent=1 // pred_region
      %33 = vsyncadd [#allocation8], 0
      %s34 = sshll.u32 %s1, 4
      %s35 = int_to_ptr.hbm [resolvable:$true] %s34
      %s36 = sshll.u32 [#allocation7], 4
      %s37 = int_to_ptr.vmem [resolvable:$true] %s36
      %42 = dma.hbm_to_vmem [thread:$0]  %s35, 256, %s37, [#allocation8], 64, 64, 4
    $region9: #{tpu_custom_call.1} parent=1 // pred_fallthru
      _
    // Predicated region
    $region10: #{tpu_custom_call.1} parent=1 // pred_check
      _
    $region11: #{tpu_custom_call.1} parent=1 // pred_check_branch
      %44 = sbr.rel (0) target = $region13
    $region12: #{tpu_custom_call.1} parent=1 // pred_region
      %46 = vsyncadd [#allocation8], 0
      %s47 = sshll.u32 %s2, 4
      %s48 = int_to_ptr.hbm [resolvable:$true] %s47
      %s49 = sshll.u32 [#allocation9], 4
      %s50 = int_to_ptr.vmem [resolvable:$true] %s49
      %55 = dma.hbm_to_vmem [thread:$0]  %s48, 256, %s50, [#allocation8], 64, 64, 4
    $region13: #{tpu_custom_call.1} parent=1 // pred_fallthru
      _
    // Predicated region
    $region14: #{tpu_custom_call.1} parent=1 // pred_check
      _
    $region15: #{tpu_custom_call.1} parent=1 // pred_check_branch
      %57 = sbr.rel (0) target = $region17
    $region16: #{tpu_custom_call.1} parent=1 // pred_region
      _
    $region17: #{tpu_custom_call.1} parent=1 // pred_fallthru
      _
    // Predicated region
    $region18: #{tpu_custom_call.1} parent=1 // pred_check
      _
    $region19: #{tpu_custom_call.1} parent=1 // pred_check_branch
      %59 = sbr.rel (0) target = $region21
    $region20: #{tpu_custom_call.1} parent=1 // pred_region
      %61 = vsyncadd [#allocation11], 0
      %s62 = sshll.u32 %s4, 4
      %s63 = int_to_ptr.hbm [resolvable:$true] %s62
      %s64 = sshll.u32 [#allocation10], 4
      %s65 = int_to_ptr.vmem [resolvable:$true] %s64
      %70 = dma.hbm_to_vmem [thread:$0]  %s63, 1024, %s65, [#allocation11], 64, 64, 4
    $region21: #{tpu_custom_call.1} parent=1 // pred_fallthru
      _
    // Predicated region
    $region22: #{tpu_custom_call.1} parent=1 // pred_check
      _
    $region23: #{tpu_custom_call.1} parent=1 // pred_check_branch
      %72 = sbr.rel (0) target = $region25
    $region24: #{tpu_custom_call.1} parent=1 // pred_region
      _
    $region25: #{tpu_custom_call.1} parent=1 // pred_fallthru
      _
    // Predicated region
    $region26: #{tpu_custom_call.1} parent=1 // pred_check
      _
    $region27: #{tpu_custom_call.1} parent=1 // pred_check_branch
      %74 = sbr.rel (0) target = $region29
    $region28: #{tpu_custom_call.1} parent=1 // pred_region
      %76 = vsyncadd [#allocation11], 0
      %s77 = sshll.u32 %s6, 4
      %s78 = int_to_ptr.hbm [resolvable:$true] %s77
      %s79 = sshll.u32 [#allocation12], 4
      %s80 = int_to_ptr.vmem [resolvable:$true] %s79
      %85 = dma.hbm_to_vmem [thread:$0]  %s78, 1024, %s80, [#allocation11], 64, 64, 4
    $region29: #{tpu_custom_call.1} parent=1 // pred_fallthru
      _
    // Predicated region
    $region30: #{tpu_custom_call.1} parent=1 // pred_check
      _
    $region31: #{tpu_custom_call.1} parent=1 // pred_check_branch
      %87 = sbr.rel (0) target = $region33
    $region32: #{tpu_custom_call.1} parent=1 // pred_region
      _
    $region33: #{tpu_custom_call.1} parent=1 // pred_fallthru
      _
    // Predicated region
    $region34: #{tpu_custom_call.1} parent=1 // pred_check
      _
    $region35: #{tpu_custom_call.1} parent=1 // pred_check_branch
      %89 = sbr.rel (0) target = $region37
    $region36: #{tpu_custom_call.1} parent=1 // pred_region
      %91 = dma.done [#allocation5], 1024
    $region37: #{tpu_custom_call.1} parent=1 // pred_fallthru
      _
    // Predicated region
    $region38: #{tpu_custom_call.1} parent=1 // pred_check
      _
    $region39: #{tpu_custom_call.1} parent=1 // pred_check_branch
      %93 = sbr.rel (0) target = $region41
    $region40: #{tpu_custom_call.1} parent=1 // pred_region
      %95 = dma.done [#allocation8], 256
    $region41: #{tpu_custom_call.1} parent=1 // pred_fallthru
      _
    // Predicated region
    $region42: #{tpu_custom_call.1} parent=1 // pred_check
      _
    $region43: #{tpu_custom_call.1} parent=1 // pred_check_branch
      %97 = sbr.rel (0) target = $region45
    $region44: #{tpu_custom_call.1} parent=1 // pred_region
      %99 = dma.done [#allocation8], 256
    $region45: #{tpu_custom_call.1} parent=1 // pred_fallthru
      _
    // Predicated region
    $region46: #{tpu_custom_call.1} parent=1 // pred_check
      _
    $region47: #{tpu_custom_call.1} parent=1 // pred_check_branch
      %101 = sbr.rel (0) target = $region49
    $region48: #{tpu_custom_call.1} parent=1 // pred_region
      %103 = dma.done [#allocation11], 1024
    $region49: #{tpu_custom_call.1} parent=1 // pred_fallthru
      _
    // Predicated region
    $region50: #{tpu_custom_call.1} parent=1 // pred_check
      _
    $region51: #{tpu_custom_call.1} parent=1 // pred_check_branch
      %105 = sbr.rel (0) target = $region53
    $region52: #{tpu_custom_call.1} parent=1 // pred_region
      %107 = dma.done [#allocation11], 1024
    $region53: #{tpu_custom_call.1} parent=1 // pred_fallthru
      _
    %p109 = scmp.eq.s32.totalorder 0, 0
    // Predicated region
    $region54: #{tpu_custom_call.1} parent=1 // pred_check
      %p110 = pneg %p109
    $region55: #{tpu_custom_call.1} parent=1 // pred_check_branch
      %112 = sbr.rel (%p110) target = $region57
    $region56: #{tpu_custom_call.1} parent=1 // pred_region
      %vm113 = vcmask 261120
      %114 = vst.msk [vmem:[#allocation2] sm:$0xff] %vm113, 0.0
      %115 = vst.msk [vmem:[#allocation3] sm:$0xff] %vm113, -inf
    $region57: #{tpu_custom_call.1} parent=1 // pred_fallthru
      _
    %v116 = vld [vmem:[#allocation4] sm:$0xff]
    %v117 = vld [vmem:[#allocation4 + $0x8] sm:$0xff]
    %v118 = vld [vmem:[#allocation4 + $0x10] sm:$0xff]
    %v119 = vld [vmem:[#allocation4 + $0x18] sm:$0xff]
    %v120 = vld [vmem:[#allocation4 + $0x20] sm:$0xff]
    %v121 = vld [vmem:[#allocation4 + $0x28] sm:$0xff]
    %v122 = vld [vmem:[#allocation4 + $0x30] sm:$0xff]
    %v123 = vld [vmem:[#allocation4 + $0x38] sm:$0xff]
    %v124 = vld [vmem:[#allocation2] sm:$0xff]
    %vm125 = vcmask 261120
    %v126 = vsel %vm125, %v116, 0.0
    %v127 = vrot.slane %v126, 4
    %v128 = vadd.f32 %v126, %v127
    %v129 = vrot.slane %v128, 2
    %v130 = vadd.f32 %v128, %v129
    %v131 = vrot.slane %v130, 1
    %v132 = vadd.f32 %v130, %v131
    %v133 = vsel %vm125, %v117, 0.0
    %v134 = vrot.slane %v133, 4
    %v135 = vadd.f32 %v133, %v134
    %v136 = vrot.slane %v135, 2
    %v137 = vadd.f32 %v135, %v136
    %v138 = vrot.slane %v137, 1
    %v139 = vadd.f32 %v137, %v138
    %v140 = vsel %vm125, %v118, 0.0
    %v141 = vrot.slane %v140, 4
    %v142 = vadd.f32 %v140, %v141
    %v143 = vrot.slane %v142, 2
    %v144 = vadd.f32 %v142, %v143
    %v145 = vrot.slane %v144, 1
    %v146 = vadd.f32 %v144, %v145
    %v147 = vsel %vm125, %v119, 0.0
    %v148 = vrot.slane %v147, 4
    %v149 = vadd.f32 %v147, %v148
    %v150 = vrot.slane %v149, 2
    %v151 = vadd.f32 %v149, %v150
    %v152 = vrot.slane %v151, 1
    %v153 = vadd.f32 %v151, %v152
    %v154 = vsel %vm125, %v120, 0.0
    %v155 = vrot.slane %v154, 4
    %v156 = vadd.f32 %v154, %v155
    %v157 = vrot.slane %v156, 2
    %v158 = vadd.f32 %v156, %v157
    %v159 = vrot.slane %v158, 1
    %v160 = vadd.f32 %v158, %v159
    %v161 = vsel %vm125, %v121, 0.0
    %v162 = vrot.slane %v161, 4
    %v163 = vadd.f32 %v161, %v162
    %v164 = vrot.slane %v163, 2
    %v165 = vadd.f32 %v163, %v164
    %v166 = vrot.slane %v165, 1
    %v167 = vadd.f32 %v165, %v166
    %v168 = vsel %vm125, %v122, 0.0
    %v169 = vrot.slane %v168, 4
    %v170 = vadd.f32 %v168, %v169
    %v171 = vrot.slane %v170, 2
    %v172 = vadd.f32 %v170, %v171
    %v173 = vrot.slane %v172, 1
    %v174 = vadd.f32 %v172, %v173
    %v175 = vsel %vm125, %v123, 0.0
    %v176 = vrot.slane %v175, 4
    %v177 = vadd.f32 %v175, %v176
    %v178 = vrot.slane %v177, 2
    %v179 = vadd.f32 %v177, %v178
    %v180 = vrot.slane %v179, 1
    %v181 = vadd.f32 %v179, %v180
    %vm190 = vcmask 1041409
    %v191 = vsel %vm190, %v139, %v132
    %vm192 = vcmask 1042434
    %v193 = vsel %vm192, %v146, %v191
    %vm194 = vcmask 1043459
    %v195 = vsel %vm194, %v153, %v193
    %vm196 = vcmask 1044484
    %v197 = vsel %vm196, %v160, %v195
    %vm198 = vcmask 1045509
    %v199 = vsel %vm198, %v167, %v197
    %vm200 = vcmask 1046534
    %v201 = vsel %vm200, %v174, %v199
    %vm202 = vcmask 1047559
    %v203 = vsel %vm202, %v181, %v201
    %v205 = vadd.f32 %v124, %v203
    %206 = vst.msk [vmem:[#allocation2] sm:$0xff] %vm125, %v205
    %v207 = vld [vmem:[#allocation3] sm:$0xff]
    %v208 = vsel %vm125, %v116, -inf
    %v209 = vrot.slane %v208, 4
    %v210 = vmax.f32 %v208, %v209
    %v211 = vrot.slane %v210, 2
    %v212 = vmax.f32 %v210, %v211
    %v213 = vrot.slane %v212, 1
    %v214 = vmax.f32 %v212, %v213
    %v215 = vsel %vm125, %v117, -inf
    %v216 = vrot.slane %v215, 4
    %v217 = vmax.f32 %v215, %v216
    %v218 = vrot.slane %v217, 2
    %v219 = vmax.f32 %v217, %v218
    %v220 = vrot.slane %v219, 1
    %v221 = vmax.f32 %v219, %v220
    %v222 = vsel %vm125, %v118, -inf
    %v223 = vrot.slane %v222, 4
    %v224 = vmax.f32 %v222, %v223
    %v225 = vrot.slane %v224, 2
    %v226 = vmax.f32 %v224, %v225
    %v227 = vrot.slane %v226, 1
    %v228 = vmax.f32 %v226, %v227
    %v229 = vsel %vm125, %v119, -inf
    %v230 = vrot.slane %v229, 4
    %v231 = vmax.f32 %v229, %v230
    %v232 = vrot.slane %v231, 2
    %v233 = vmax.f32 %v231, %v232
    %v234 = vrot.slane %v233, 1
    %v235 = vmax.f32 %v233, %v234
    %v236 = vsel %vm125, %v120, -inf
    %v237 = vrot.slane %v236, 4
    %v238 = vmax.f32 %v236, %v237
    %v239 = vrot.slane %v238, 2
    %v240 = vmax.f32 %v238, %v239
    %v241 = vrot.slane %v240, 1
    %v242 = vmax.f32 %v240, %v241
    %v243 = vsel %vm125, %v121, -inf
    %v244 = vrot.slane %v243, 4
    %v245 = vmax.f32 %v243, %v244
    %v246 = vrot.slane %v245, 2
    %v247 = vmax.f32 %v245, %v246
    %v248 = vrot.slane %v247, 1
    %v249 = vmax.f32 %v247, %v248
    %v250 = vsel %vm125, %v122, -inf
    %v251 = vrot.slane %v250, 4
    %v252 = vmax.f32 %v250, %v251
    %v253 = vrot.slane %v252, 2
    %v254 = vmax.f32 %v252, %v253
    %v255 = vrot.slane %v254, 1
    %v256 = vmax.f32 %v254, %v255
    %v257 = vsel %vm125, %v123, -inf
    %v258 = vrot.slane %v257, 4
    %v259 = vmax.f32 %v257, %v258
    %v260 = vrot.slane %v259, 2
    %v261 = vmax.f32 %v259, %v260
    %v262 = vrot.slane %v261, 1
    %v263 = vmax.f32 %v261, %v262
    %v272 = vsel %vm190, %v221, %v214
    %v273 = vsel %vm192, %v228, %v272
    %v274 = vsel %vm194, %v235, %v273
    %v275 = vsel %vm196, %v242, %v274
    %v276 = vsel %vm198, %v249, %v275
    %v277 = vsel %vm200, %v256, %v276
    %v278 = vsel %vm202, %v263, %v277
    %v280 = vmax.f32 %v207, %v278
    %281 = vst.msk [vmem:[#allocation3] sm:$0xff] %vm125, %v280
    // Predicated region
    $region58: #{tpu_custom_call.1} parent=1 // pred_check
      %p282 = pneg %p109
    $region59: #{tpu_custom_call.1} parent=1 // pred_check_branch
      %284 = sbr.rel (%p282) target = $region61
    $region60: #{tpu_custom_call.1} parent=1 // pred_region
      %v285 = vld [vmem:[#allocation2] sm:$0xff]
      %v286 = vmul.f32 %v285, 0.125
      %v287 = vld [vmem:[#allocation3] sm:$0xff]
      %v288 = vpack.c.bf16 %v286, %v286
      %v289 = vld [vmem:[#allocation7] sm:$0xf]
      %v290 = vld [vmem:[#allocation7 + $0x4] sm:$0xf]
      %v291 = vld [vmem:[#allocation7 + $0x8] sm:$0xf]
      %v292 = vld [vmem:[#allocation7 + $0xc] sm:$0xf]
      %v293 = vpack.c.bf16 %v287, %v287
      %v294 = vld [vmem:[#allocation9] sm:$0xf]
      %v295 = vld [vmem:[#allocation9 + $0x4] sm:$0xf]
      %v296 = vld [vmem:[#allocation9 + $0x8] sm:$0xf]
      %v297 = vld [vmem:[#allocation9 + $0xc] sm:$0xf]
      %v302 = vunpack.c.l.b16 %v294
      %v303 = vunpack.c.l.b16 %v295
      %v304 = vunpack.c.l.b16 %v296
      %v305 = vunpack.c.l.b16 %v297
      %v306 = vpack.c.b16 %v303, %v302
      %v307 = vpack.c.b16 %v305, %v304
      %v311 = vsel %vm125, %v293, 0
      %313 = vmatpush.bf16.msra.mxu0 0
      %314 = vmatpush.bf16.msra.mxu0 0
      %315 = vmatpush.bf16.msra.mxu0 0
      %316 = vmatpush.bf16.msra.mxu0 0
      %317 = vmatpush.bf16.msra.mxu0 0
      %318 = vmatpush.bf16.msra.mxu0 0
      %319 = vmatpush.bf16.msra.mxu0 %v307
      %320 = vmatpush.bf16.msra.mxu0 %v306
      %321 = vmatmul.bf16.gmra.mxu0 %v311
      %v322 = vpop.f32.mrf.mxu0
      %v323 = vadd.f32 0.0, %v322
      %v324 = vpop.f32.mrf.mxu0
      %325 = vdwg.mxu0
      %v330 = vunpack.c.l.b16 %v289
      %v331 = vunpack.c.l.b16 %v290
      %v332 = vunpack.c.l.b16 %v291
      %v333 = vunpack.c.l.b16 %v292
      %v334 = vpack.c.b16 %v331, %v330
      %v335 = vpack.c.b16 %v333, %v332
      %v339 = vsel %vm125, %v288, 0
      %341 = vmatpush.bf16.msra.mxu0 0
      %342 = vmatpush.bf16.msra.mxu0 0
      %343 = vmatpush.bf16.msra.mxu0 0
      %344 = vmatpush.bf16.msra.mxu0 0
      %345 = vmatpush.bf16.msra.mxu0 0
      %346 = vmatpush.bf16.msra.mxu0 0
      %347 = vmatpush.bf16.msra.mxu0 %v335
      %348 = vmatpush.bf16.msra.mxu0 %v334
      %349 = vmatmul.bf16.gmra.mxu0 %v339
      %v350 = vpop.f32.mrf.mxu0
      %v351 = vadd.f32 %v323, %v350
      %v352 = vpop.f32.mrf.mxu0
      %353 = vdwg.mxu0
      %v354 = vld [vmem:[%s3] sm:$0x1]
      %v356 = vperm.slane %v354, 0
      %v358 = vadd.f32 %v351, %v356
      %v359 = vmul.f32 %v358, 0.5
      %v360 = vmul.f32 %v358, 0.70710677
      %v361 = vmul.f32 %v360, %v360
      %v362 = vmin.f32 16.0, %v361
      %v363 = vmul.f32 %v362, 2.1237322e-06
      %v364 = vadd.f32 %v363, 0.00028619796
      %v365 = vmul.f32 %v362, %v364
      %v366 = vadd.f32 %v365, 0.0036580483
      %v367 = vmul.f32 %v362, %v366
      %v368 = vadd.f32 %v367, 0.05243302
      %v369 = vmul.f32 %v362, %v368
      %v370 = vadd.f32 %v369, 0.18741608
      %v371 = vmul.f32 %v362, %v370
      %v372 = vadd.f32 %v371, 1.1283791
      %v373 = vmul.f32 %v360, %v372
      %v374 = vmul.f32 %v362, 3.8918573e-05
      %v375 = vadd.f32 %v374, 0.001143296
      %v376 = vmul.f32 %v362, %v375
      %v377 = vadd.f32 %v376, 0.014752088
      %v378 = vmul.f32 %v362, %v377
      %v379 = vadd.f32 %v378, 0.112945676
      %v380 = vmul.f32 %v362, %v379
      %v381 = vadd.f32 %v380, 0.4994258
      %v382 = vmul.f32 %v362, %v381
      %v383 = vadd.f32 %v382, 1.0
      %v384 = vrcp.pop %v383
      %v385 = vmul.f32 %v383, %v384
      %v386 = vsub.f32 1.0, %v385
      %v387 = vmul.f32 %v384, %v386
      %v388 = vadd.f32 %v384, %v387
      %vm389 = vweird.f32 %v383
      %vm390 = vweird.f32 %v384
      %vm391 = vmor %vm389, %vm390
      %v392 = vsel %vm391, %v384, %v388
      %v393 = vand.u32 2147483647, %v383
      %vm394 = vcmp.eq.f32.partialorder %v393, 8.507059e+37
      %v395 = vand.u32 %v383, 2147483648
      %v396 = vor.u32 1.1754944e-38, %v395
      %v397 = vsel %vm394, %v396, %v392
      %v398 = vmul.f32 %v373, %v397
      %v399 = vmin.f32 %v398, 1.0
      %v400 = vmax.f32 %v399, -1.0
      %v401 = vadd.f32 %v400, 1.0
      %v402 = vmul.f32 %v359, %v401
      %v403 = vpack.c.bf16 %v402, %v402
      %v404 = vld [vmem:[#allocation10] sm:$0xf]
      %v405 = vld [vmem:[#allocation10 + $0x4] sm:$0xf]
      %v406 = vld [vmem:[#allocation10 + $0x8] sm:$0xf]
      %v407 = vld [vmem:[#allocation10 + $0xc] sm:$0xf]
      %v408 = vld [vmem:[#allocation10 + $0x10] sm:$0xf]
      %v409 = vld [vmem:[#allocation10 + $0x14] sm:$0xf]
      %v410 = vld [vmem:[#allocation10 + $0x18] sm:$0xf]
      %v411 = vld [vmem:[#allocation10 + $0x1c] sm:$0xf]
      %v412 = vld [vmem:[#allocation10 + $0x20] sm:$0xf]
      %v413 = vld [vmem:[#allocation10 + $0x24] sm:$0xf]
      %v414 = vld [vmem:[#allocation10 + $0x28] sm:$0xf]
      %v415 = vld [vmem:[#allocation10 + $0x2c] sm:$0xf]
      %v416 = vld [vmem:[#allocation10 + $0x30] sm:$0xf]
      %v417 = vld [vmem:[#allocation10 + $0x34] sm:$0xf]
      %v418 = vld [vmem:[#allocation10 + $0x38] sm:$0xf]
      %v419 = vld [vmem:[#allocation10 + $0x3c] sm:$0xf]
      %v420 = vld [vmem:[%s5] sm:$0x1]
      %v422 = vperm.slane %v420, 0
      %v440 = vunpack.c.l.b16 %v404
      %v441 = vunpack.c.l.b16 %v405
      %v442 = vunpack.c.l.b16 %v406
      %v443 = vunpack.c.l.b16 %v407
      %v444 = vunpack.c.l.b16 %v408
      %v445 = vunpack.c.l.b16 %v409
      %v446 = vunpack.c.l.b16 %v410
      %v447 = vunpack.c.l.b16 %v411
      %v448 = vunpack.c.l.b16 %v412
      %v449 = vunpack.c.l.b16 %v413
      %v450 = vunpack.c.l.b16 %v414
      %v451 = vunpack.c.l.b16 %v415
      %v452 = vunpack.c.l.b16 %v416
      %v453 = vunpack.c.l.b16 %v417
      %v454 = vunpack.c.l.b16 %v418
      %v455 = vunpack.c.l.b16 %v419
      %v456 = vpack.c.b16 %v441, %v440
      %v457 = vpack.c.b16 %v443, %v442
      %v458 = vpack.c.b16 %v445, %v444
      %v459 = vpack.c.b16 %v447, %v446
      %v460 = vpack.c.b16 %v449, %v448
      %v461 = vpack.c.b16 %v451, %v450
      %v462 = vpack.c.b16 %v453, %v452
      %v463 = vpack.c.b16 %v455, %v454
      %472 = vmatpush.bf16.msra.mxu0 %v463
      %473 = vmatpush.bf16.msra.mxu0 %v462
      %474 = vmatpush.bf16.msra.mxu0 %v461
      %475 = vmatpush.bf16.msra.mxu0 %v460
      %476 = vmatpush.bf16.msra.mxu0 %v459
      %477 = vmatpush.bf16.msra.mxu0 %v458
      %478 = vmatpush.bf16.msra.mxu0 %v457
      %479 = vmatpush.bf16.msra.mxu0 %v456
      %480 = vmatmul.bf16.gmra.mxu0 %v403
      %v481 = vpop.f32.mrf.mxu0
      %v482 = vadd.f32 %v422, %v481
      %v483 = vpop.f32.mrf.mxu0
      %484 = vdwg.mxu0
      %v485 = vmul.f32 %v482, 0.5
      %v486 = vmul.f32 %v482, 0.70710677
      %v487 = vmul.f32 %v486, %v486
      %v488 = vmin.f32 16.0, %v487
      %v489 = vmul.f32 %v488, 2.1237322e-06
      %v490 = vadd.f32 %v489, 0.00028619796
      %v491 = vmul.f32 %v488, %v490
      %v492 = vadd.f32 %v491, 0.0036580483
      %v493 = vmul.f32 %v488, %v492
      %v494 = vadd.f32 %v493, 0.05243302
      %v495 = vmul.f32 %v488, %v494
      %v496 = vadd.f32 %v495, 0.18741608
      %v497 = vmul.f32 %v488, %v496
      %v498 = vadd.f32 %v497, 1.1283791
      %v499 = vmul.f32 %v486, %v498
      %v500 = vmul.f32 %v488, 3.8918573e-05
      %v501 = vadd.f32 %v500, 0.001143296
      %v502 = vmul.f32 %v488, %v501
      %v503 = vadd.f32 %v502, 0.014752088
      %v504 = vmul.f32 %v488, %v503
      %v505 = vadd.f32 %v504, 0.112945676
      %v506 = vmul.f32 %v488, %v505
      %v507 = vadd.f32 %v506, 0.4994258
      %v508 = vmul.f32 %v488, %v507
      %v509 = vadd.f32 %v508, 1.0
      %v510 = vrcp.pop %v509
      %v511 = vmul.f32 %v509, %v510
      %v512 = vsub.f32 1.0, %v511
      %v513 = vmul.f32 %v510, %v512
      %v514 = vadd.f32 %v510, %v513
      %vm515 = vweird.f32 %v509
      %vm516 = vweird.f32 %v510
      %vm517 = vmor %vm515, %vm516
      %v518 = vsel %vm517, %v510, %v514
      %v519 = vand.u32 2147483647, %v509
      %vm520 = vcmp.eq.f32.partialorder %v519, 8.507059e+37
      %v521 = vand.u32 %v509, 2147483648
      %v522 = vor.u32 1.1754944e-38, %v521
      %v523 = vsel %vm520, %v522, %v518
      %v524 = vmul.f32 %v499, %v523
      %v525 = vmin.f32 %v524, 1.0
      %v526 = vmax.f32 %v525, -1.0
      %v527 = vadd.f32 %v526, 1.0
      %v528 = vmul.f32 %v485, %v527
      %v529 = vpack.c.bf16 %v528, %v528
      %v530 = vld [vmem:[#allocation12] sm:$0xf]
      %v531 = vld [vmem:[#allocation12 + $0x4] sm:$0xf]
      %v532 = vld [vmem:[#allocation12 + $0x8] sm:$0xf]
      %v533 = vld [vmem:[#allocation12 + $0xc] sm:$0xf]
      %v534 = vld [vmem:[#allocation12 + $0x10] sm:$0xf]
      %v535 = vld [vmem:[#allocation12 + $0x14] sm:$0xf]
      %v536 = vld [vmem:[#allocation12 + $0x18] sm:$0xf]
      %v537 = vld [vmem:[#allocation12 + $0x1c] sm:$0xf]
      %v538 = vld [vmem:[#allocation12 + $0x20] sm:$0xf]
      %v539 = vld [vmem:[#allocation12 + $0x24] sm:$0xf]
      %v540 = vld [vmem:[#allocation12 + $0x28] sm:$0xf]
      %v541 = vld [vmem:[#allocation12 + $0x2c] sm:$0xf]
      %v542 = vld [vmem:[#allocation12 + $0x30] sm:$0xf]
      %v543 = vld [vmem:[#allocation12 + $0x34] sm:$0xf]
      %v544 = vld [vmem:[#allocation12 + $0x38] sm:$0xf]
      %v545 = vld [vmem:[#allocation12 + $0x3c] sm:$0xf]
      %v546 = vld [vmem:[%s7] sm:$0x1]
      %v548 = vperm.slane %v546, 0
      %v566 = vunpack.c.l.b16 %v530
      %v567 = vunpack.c.l.b16 %v531
      %v568 = vunpack.c.l.b16 %v532
      %v569 = vunpack.c.l.b16 %v533
      %v570 = vunpack.c.l.b16 %v534
      %v571 = vunpack.c.l.b16 %v535
      %v572 = vunpack.c.l.b16 %v536
      %v573 = vunpack.c.l.b16 %v537
      %v574 = vunpack.c.l.b16 %v538
      %v575 = vunpack.c.l.b16 %v539
      %v576 = vunpack.c.l.b16 %v540
      %v577 = vunpack.c.l.b16 %v541
      %v578 = vunpack.c.l.b16 %v542
      %v579 = vunpack.c.l.b16 %v543
      %v580 = vunpack.c.l.b16 %v544
      %v581 = vunpack.c.l.b16 %v545
      %v582 = vpack.c.b16 %v567, %v566
      %v583 = vpack.c.b16 %v569, %v568
      %v584 = vpack.c.b16 %v571, %v570
      %v585 = vpack.c.b16 %v573, %v572
      %v586 = vpack.c.b16 %v575, %v574
      %v587 = vpack.c.b16 %v577, %v576
      %v588 = vpack.c.b16 %v579, %v578
      %v589 = vpack.c.b16 %v581, %v580
      %598 = vmatpush.bf16.msra.mxu0 %v589
      %599 = vmatpush.bf16.msra.mxu0 %v588
      %600 = vmatpush.bf16.msra.mxu0 %v587
      %601 = vmatpush.bf16.msra.mxu0 %v586
      %602 = vmatpush.bf16.msra.mxu0 %v585
      %603 = vmatpush.bf16.msra.mxu0 %v584
      %604 = vmatpush.bf16.msra.mxu0 %v583
      %605 = vmatpush.bf16.msra.mxu0 %v582
      %606 = vmatmul.bf16.gmra.mxu0 %v529
      %v607 = vpop.f32.mrf.mxu0
      %v608 = vadd.f32 %v548, %v607
      %v609 = vpop.f32.mrf.mxu0
      %610 = vdwg.mxu0
      %611 = vst [vmem:[#allocation13] sm:$0xff] %v608
    $region61: #{tpu_custom_call.1} parent=1 // pred_fallthru
      _
    // Predicated region
    $region62: #{tpu_custom_call.1} parent=1 // pred_check
      _
    $region63: #{tpu_custom_call.1} parent=1 // pred_check_branch
      %613 = sbr.rel (0) target = $region65
    $region64: #{tpu_custom_call.1} parent=1 // pred_region
      %615 = vsyncadd [#allocation6], 0
      %s617 = sshll.u32 [#allocation13], 4
      %s618 = int_to_ptr.vmem [resolvable:$true] %s617
      %s619 = sshll.u32 %s8, 4
      %s620 = int_to_ptr.hbm [resolvable:$true] %s619
      %622 = dma.vmem_to_hbm [thread:$0]  %s618, 128, %s620, [#allocation6]
    $region65: #{tpu_custom_call.1} parent=1 // pred_fallthru
      _
    // Predicated region
    $region66: #{tpu_custom_call.1} parent=1 // pred_check
      _
    $region67: #{tpu_custom_call.1} parent=1 // pred_check_branch
      %624 = sbr.rel (0) target = $region69
    $region68: #{tpu_custom_call.1} parent=1 // pred_region
      %626 = dma.done [#allocation6], 128
    $region69: #{tpu_custom_call.1} parent=1 // pred_fallthru
      _
    %627 = vsyncpa [#allocation5], 1
    %628 = vsyncpa [#allocation8], 1
    %629 = vsyncpa [#allocation11], 1
    %630 = vsyncpa [#allocation6], 1

</llo_original>
